<compile_context>
chip_gen: v7x
topology: tpu7x:2x2x1
jax: 0.10.0
libtpu: 0.0.40
codegen_flags: <defaults>
</compile_context>

<pallas_src>
import jax
import jax.numpy as jnp
from jax.experimental import pallas as pl
from jax.experimental.pallas import tpu as pltpu

# mu / log_std each get one full 128-lane tile in the padded final layer.
ACTION_PAD = 128


def _round_up(x, m):
    return ((x + m - 1) // m) * m


def _make_actor_kernel(num_layers, ad_pad, log_std_min, log_std_max):
    """Kernel closure over static layer count, pad width and log-std bounds."""

    def kernel(*refs):
        # refs = (x, w0, b0, ..., w_{L-1}, b_{L-1}, mu_out, std_out)
        x_ref = refs[0]
        param_refs = refs[1: 1 + 2 * num_layers]
        mu_ref = refs[1 + 2 * num_layers]
        std_ref = refs[2 + 2 * num_layers]

        h = x_ref[...].astype(jnp.float32)
        for i in range(num_layers):
            w = param_refs[2 * i][...]                       # bf16 (or f32) weights
            b = param_refs[2 * i + 1][...].astype(jnp.float32)  # f32 bias, loaded once
            # bf16 x bf16 -> f32 accumulation on the MXU; elementwise tail in f32.
            h = jnp.dot(h.astype(w.dtype), w,
                        preferred_element_type=jnp.float32) + b
            if i < num_layers - 1:                           # ReLU on hidden layers only
                h = jnp.maximum(h, 0.0)

        # Tile-aligned chunk: mu in lanes [0, ad_pad), log_std in [ad_pad, 2*ad_pad).
        mu = h[:, :ad_pad]
        log_std = h[:, ad_pad:]

        log_std = jnp.tanh(log_std)
        log_std = log_std_min + 0.5 * (log_std_max - log_std_min) * (log_std + 1.0)
        std = jnp.exp(log_std)

        mu_ref[...] = mu.astype(mu_ref.dtype)
        std_ref[...] = std.astype(std_ref.dtype)

    return kernel


def diag_truncated_gaussian_actor(obs, params, action_dim, log_std_bounds,
                                  *, block_batch=128):
    """Actor forward pass.

    obs:    [B, obs_dim] float32
    params: flat list [w0, b0, ...]; w_i: [in, out] (final out = 2*ACTION_PAD,
            mu cols in [0, action_dim), log_std cols in [ACTION_PAD,
            ACTION_PAD+action_dim)); b_i: [1, out] float32.
    Returns (mu, std), both [B, action_dim] float32.
    """
    assert len(params) % 2 == 0
    assert action_dim <= ACTION_PAD
    num_layers = len(params) // 2
    B, obs_dim = obs.shape
    log_std_min, log_std_max = log_std_bounds

    # Pad batch to a multiple of the batch tile so every MXU pass gets a full
    # (or near-full) row count and the output stores are dense.
    b_pad = _round_up(max(B, 1), block_batch)
    if b_pad != B:
        obs = jnp.pad(obs, ((0, b_pad - B), (0, 0)))

    grid = (b_pad // block_batch,)

    kernel = _make_actor_kernel(num_layers, ACTION_PAD,
                                float(log_std_min), float(log_std_max))

    # obs / outputs stream over the batch grid; weights & biases are resident
    # (constant block index -> no re-DMA across grid steps).
    in_specs = [pl.BlockSpec((block_batch, obs_dim), lambda i: (i, 0))]
    for p in params:
        in_specs.append(pl.BlockSpec(p.shape, lambda i: (0, 0)))

    out_specs = (
        pl.BlockSpec((block_batch, ACTION_PAD), lambda i: (i, 0)),
        pl.BlockSpec((block_batch, ACTION_PAD), lambda i: (i, 0)),
    )
    out_shape = (
        jax.ShapeDtypeStruct((b_pad, ACTION_PAD), jnp.float32),  # mu (padded)
        jax.ShapeDtypeStruct((b_pad, ACTION_PAD), jnp.float32),  # std (padded)
    )

    mu_p, std_p = pl.pallas_call(
        kernel,
        grid=grid,
        in_specs=in_specs,
        out_specs=out_specs,
        out_shape=out_shape,
        compiler_params=pltpu.CompilerParams(
            dimension_semantics=("parallel",),  # v7x: shard batch tiles over 2 TCs
        ),
    )(obs, *params)

    # Drop batch / lane padding outside the kernel (lane-dense stores inside).
    return mu_p[:B, :action_dim], std_p[:B, :action_dim]


def init_actor_params(key, obs_dim, hidden_dim, action_dim, hidden_depth,
                      param_dtype=jnp.bfloat16):
    """Init matching utils.mlp layer shapes, stored [in, out] for the kernel.

    The final layer is padded to 2*ACTION_PAD output columns:
      mu weights -> cols [0, action_dim), log_std weights -> cols
      [ACTION_PAD, ACTION_PAD + action_dim); the rest is zero.
    Weights are cast to `param_dtype` (bf16 by default); biases stay float32.
    """
    dims = [obs_dim] + [hidden_dim] * hidden_depth + [2 * action_dim]
    params = []
    for i in range(len(dims) - 1):
        key, wk = jax.random.split(key)
        fan_in, fan_out = dims[i], dims[i + 1]
        w = jax.random.normal(wk, (fan_in, fan_out), jnp.float32) / jnp.sqrt(fan_in)
        b = jnp.zeros((fan_out,), jnp.float32)
        if i == len(dims) - 2:  # final layer: split mu / log_std into aligned tiles
            w_pad = jnp.zeros((fan_in, 2 * ACTION_PAD), jnp.float32)
            w_pad = w_pad.at[:, :action_dim].set(w[:, :action_dim])
            w_pad = w_pad.at[:, ACTION_PAD:ACTION_PAD + action_dim].set(w[:, action_dim:])
            b_pad = jnp.zeros((2 * ACTION_PAD,), jnp.float32)
            b_pad = b_pad.at[:action_dim].set(b[:action_dim])
            b_pad = b_pad.at[ACTION_PAD:ACTION_PAD + action_dim].set(b[action_dim:])
            w, b = w_pad, b_pad
        params.append(w.astype(param_dtype))
        params.append(b.reshape(1, -1).astype(jnp.float32))
    return params


def _ref_forward(obs, params, action_dim, log_std_bounds):
    """Plain-JAX reference with the same bf16-matmul / f32-accumulate math."""
    h = obs.astype(jnp.float32)
    n = len(params) // 2
    for i in range(n):
        w = params[2 * i]
        b = params[2 * i + 1].astype(jnp.float32)
        h = jnp.dot(h.astype(w.dtype), w, preferred_element_type=jnp.float32) + b
        if i < n - 1:
            h = jnp.maximum(h, 0.0)
    mu = h[:, :action_dim]
    log_std = jnp.tanh(h[:, ACTION_PAD:ACTION_PAD + action_dim])
    lo, hi = log_std_bounds
    log_std = lo + 0.5 * (hi - lo) * (log_std + 1.0)
    return mu, jnp.exp(log_std)


if __name__ == "__main__":
    obs_dim = 32
    hidden_dim = 128
    hidden_depth = 2
    action_dim = 4
    log_std_bounds = (-10.0, 2.0)

    key = jax.random.PRNGKey(0)
    key, obs_key, obs_key2 = jax.random.split(key, 3)
    params = init_actor_params(key, obs_dim, hidden_dim, action_dim, hidden_depth)

    # Case 1: tiny batch (padded to one 128-row tile).
    obs = jax.random.normal(obs_key, (8, obs_dim), jnp.float32)
    mu, std = diag_truncated_gaussian_actor(obs, params, action_dim, log_std_bounds)
    jax.block_until_ready((mu, std))
    mu_r, std_r = _ref_forward(obs, params, action_dim, log_std_bounds)
    assert mu.shape == (8, action_dim) and std.shape == (8, action_dim)
    assert jnp.allclose(mu, mu_r, atol=1e-2, rtol=1e-2)
    assert jnp.allclose(std, std_r, atol=1e-2, rtol=1e-2)
    assert bool(jnp.all(std > 0.0))

    # Case 2: non-multiple batch exercising a multi-step batch grid.
    obs2 = jax.random.normal(obs_key2, (200, obs_dim), jnp.float32)
    mu2, std2 = diag_truncated_gaussian_actor(obs2, params, action_dim, log_std_bounds)
    jax.block_until_ready((mu2, std2))
    mu2_r, std2_r = _ref_forward(obs2, params, action_dim, log_std_bounds)
    assert mu2.shape == (200, action_dim) and std2.shape == (200, action_dim)
    assert jnp.allclose(mu2, mu2_r, atol=1e-2, rtol=1e-2)
    assert jnp.allclose(std2, std2_r, atol=1e-2, rtol=1e-2)

    print("KERNEL_OK")
</pallas_src>

<mosaic_0001>
module attributes {stable_mosaic.version = 11 : i64} {
  func.func @kernel(%arg0: i32, %arg1: memref<128x32xf32, #tpu.memory_space<vmem>>, %arg2: memref<32x128xbf16, #tpu.memory_space<vmem>>, %arg3: memref<1x128xf32, #tpu.memory_space<vmem>>, %arg4: memref<128x128xbf16, #tpu.memory_space<vmem>>, %arg5: memref<1x128xf32, #tpu.memory_space<vmem>>, %arg6: memref<128x256xbf16, #tpu.memory_space<vmem>>, %arg7: memref<1x256xf32, #tpu.memory_space<vmem>>, %arg8: memref<128x128xf32, #tpu.memory_space<vmem>>, %arg9: memref<128x128xf32, #tpu.memory_space<vmem>>) attributes {dimension_semantics = [#tpu.dimension_semantics<parallel>], iteration_bounds = array<i64: 1>, scalar_prefetch = 0 : i64, scratch_operands = 0 : i64, tpu.core_type = #tpu.core_type<tc>, window_params = [{transform_indices = @transform_0, window_bounds = array<i64: 128, 32>}, {pipeline_mode = #tpu.pipeline_mode<synchronous>, transform_indices = @transform_1, window_bounds = array<i64: 32, 128>}, {pipeline_mode = #tpu.pipeline_mode<synchronous>, transform_indices = @transform_2, window_bounds = array<i64: 1, 128>}, {pipeline_mode = #tpu.pipeline_mode<synchronous>, transform_indices = @transform_3, window_bounds = array<i64: 128, 128>}, {pipeline_mode = #tpu.pipeline_mode<synchronous>, transform_indices = @transform_4, window_bounds = array<i64: 1, 128>}, {pipeline_mode = #tpu.pipeline_mode<synchronous>, transform_indices = @transform_5, window_bounds = array<i64: 128, 256>}, {pipeline_mode = #tpu.pipeline_mode<synchronous>, transform_indices = @transform_6, window_bounds = array<i64: 1, 256>}, {transform_indices = @transform_7, window_bounds = array<i64: 128, 128>}, {transform_indices = @transform_8, window_bounds = array<i64: 128, 128>}]} {
    %c0 = arith.constant 0 : index
    %c0_0 = arith.constant 0 : index
    %0 = vector.load %arg1[%c0, %c0_0] : memref<128x32xf32, #tpu.memory_space<vmem>>, vector<128x32xf32>
    %c0_1 = arith.constant 0 : index
    %c0_2 = arith.constant 0 : index
    %1 = vector.load %arg2[%c0_1, %c0_2] : memref<32x128xbf16, #tpu.memory_space<vmem>>, vector<32x128xbf16>
    %c0_3 = arith.constant 0 : index
    %c0_4 = arith.constant 0 : index
    %2 = vector.load %arg3[%c0_3, %c0_4] : memref<1x128xf32, #tpu.memory_space<vmem>>, vector<1x128xf32>
    %3 = arith.truncf %0 : vector<128x32xf32> to vector<128x32xbf16>
    %cst = arith.constant dense<0.000000e+00> : vector<128x128xf32>
    %4 = tpu.matmul %3, %1, %cst {dimension_numbers = #tpu.dot_dimension_numbers<[1], [0], [0], [1], [0, 0, 1, 1], [], []>} : vector<128x32xbf16>, vector<32x128xbf16>, vector<128x128xf32> -> vector<128x128xf32>
    %5 = vector.broadcast %2 : vector<1x128xf32> to vector<128x128xf32>
    %6 = arith.addf %4, %5 : vector<128x128xf32>
    %cst_5 = arith.constant 0.000000e+00 : f32
    %7 = vector.broadcast %cst_5 : f32 to vector<128x128xf32>
    %8 = arith.maximumf %6, %7 : vector<128x128xf32>
    %c0_6 = arith.constant 0 : index
    %c0_7 = arith.constant 0 : index
    %9 = vector.load %arg4[%c0_6, %c0_7] : memref<128x128xbf16, #tpu.memory_space<vmem>>, vector<128x128xbf16>
    %c0_8 = arith.constant 0 : index
    %c0_9 = arith.constant 0 : index
    %10 = vector.load %arg5[%c0_8, %c0_9] : memref<1x128xf32, #tpu.memory_space<vmem>>, vector<1x128xf32>
    %11 = arith.truncf %8 : vector<128x128xf32> to vector<128x128xbf16>
    %cst_10 = arith.constant dense<0.000000e+00> : vector<128x128xf32>
    %12 = tpu.matmul %11, %9, %cst_10 {dimension_numbers = #tpu.dot_dimension_numbers<[1], [0], [0], [1], [0, 0, 1, 1], [], []>} : vector<128x128xbf16>, vector<128x128xbf16>, vector<128x128xf32> -> vector<128x128xf32>
    %13 = vector.broadcast %10 : vector<1x128xf32> to vector<128x128xf32>
    %14 = arith.addf %12, %13 : vector<128x128xf32>
    %cst_11 = arith.constant 0.000000e+00 : f32
    %15 = vector.broadcast %cst_11 : f32 to vector<128x128xf32>
    %16 = arith.maximumf %14, %15 : vector<128x128xf32>
    %c0_12 = arith.constant 0 : index
    %c0_13 = arith.constant 0 : index
    %17 = vector.load %arg6[%c0_12, %c0_13] : memref<128x256xbf16, #tpu.memory_space<vmem>>, vector<128x256xbf16>
    %c0_14 = arith.constant 0 : index
    %c0_15 = arith.constant 0 : index
    %18 = vector.load %arg7[%c0_14, %c0_15] : memref<1x256xf32, #tpu.memory_space<vmem>>, vector<1x256xf32>
    %19 = arith.truncf %16 : vector<128x128xf32> to vector<128x128xbf16>
    %cst_16 = arith.constant dense<0.000000e+00> : vector<128x256xf32>
    %20 = tpu.matmul %19, %17, %cst_16 {dimension_numbers = #tpu.dot_dimension_numbers<[1], [0], [0], [1], [0, 0, 1, 1], [], []>} : vector<128x128xbf16>, vector<128x256xbf16>, vector<128x256xf32> -> vector<128x256xf32>
    %21 = vector.broadcast %18 : vector<1x256xf32> to vector<128x256xf32>
    %22 = arith.addf %20, %21 : vector<128x256xf32>
    %23 = vector.extract_strided_slice %22 {offsets = [0, 0], sizes = [128, 128], strides = [1, 1]} : vector<128x256xf32> to vector<128x128xf32>
    %24 = vector.extract_strided_slice %22 {offsets = [0, 128], sizes = [128, 128], strides = [1, 1]} : vector<128x256xf32> to vector<128x128xf32>
    %25 = math.tanh %24 : vector<128x128xf32>
    %cst_17 = arith.constant 1.000000e+00 : f32
    %26 = vector.broadcast %cst_17 : f32 to vector<128x128xf32>
    %27 = arith.addf %25, %26 : vector<128x128xf32>
    %cst_18 = arith.constant 6.000000e+00 : f32
    %28 = vector.broadcast %cst_18 : f32 to vector<128x128xf32>
    %29 = arith.mulf %28, %27 : vector<128x128xf32>
    %cst_19 = arith.constant -1.000000e+01 : f32
    %30 = vector.broadcast %cst_19 : f32 to vector<128x128xf32>
    %31 = arith.addf %30, %29 : vector<128x128xf32>
    %32 = math.exp %31 : vector<128x128xf32>
    %c0_20 = arith.constant 0 : index
    %c0_21 = arith.constant 0 : index
    %33 = vector.load %arg8[%c0_20, %c0_21] : memref<128x128xf32, #tpu.memory_space<vmem>>, vector<128x128xf32>
    tpu.vector_store %arg8[%c0_20, %c0_21], %23 {strides = array<i32>} : memref<128x128xf32, #tpu.memory_space<vmem>>, vector<128x128xf32>,
    %c0_22 = arith.constant 0 : index
    %c0_23 = arith.constant 0 : index
    %34 = vector.load %arg9[%c0_22, %c0_23] : memref<128x128xf32, #tpu.memory_space<vmem>>, vector<128x128xf32>
    tpu.vector_store %arg9[%c0_22, %c0_23], %32 {strides = array<i32>} : memref<128x128xf32, #tpu.memory_space<vmem>>, vector<128x128xf32>,
    return
  }
  func.func @transform_0(%arg0: i32) -> (i32, i32) {
    %c0_i32 = arith.constant 0 : i32
    %c0_i32_0 = arith.constant 0 : i32
    return %arg0, %c0_i32 : i32, i32
  }
  func.func @transform_1(%arg0: i32) -> (i32, i32) {
    %c0_i32 = arith.constant 0 : i32
    %c0_i32_0 = arith.constant 0 : i32
    %c0_i32_1 = arith.constant 0 : i32
    return %c0_i32, %c0_i32_0 : i32, i32
  }
  func.func @transform_2(%arg0: i32) -> (i32, i32) {
    %c0_i32 = arith.constant 0 : i32
    %c0_i32_0 = arith.constant 0 : i32
    %c0_i32_1 = arith.constant 0 : i32
    return %c0_i32, %c0_i32_0 : i32, i32
  }
  func.func @transform_3(%arg0: i32) -> (i32, i32) {
    %c0_i32 = arith.constant 0 : i32
    %c0_i32_0 = arith.constant 0 : i32
    %c0_i32_1 = arith.constant 0 : i32
    return %c0_i32, %c0_i32_0 : i32, i32
  }
  func.func @transform_4(%arg0: i32) -> (i32, i32) {
    %c0_i32 = arith.constant 0 : i32
    %c0_i32_0 = arith.constant 0 : i32
    %c0_i32_1 = arith.constant 0 : i32
    return %c0_i32, %c0_i32_0 : i32, i32
  }
  func.func @transform_5(%arg0: i32) -> (i32, i32) {
    %c0_i32 = arith.constant 0 : i32
    %c0_i32_0 = arith.constant 0 : i32
    %c0_i32_1 = arith.constant 0 : i32
    return %c0_i32, %c0_i32_0 : i32, i32
  }
  func.func @transform_6(%arg0: i32) -> (i32, i32) {
    %c0_i32 = arith.constant 0 : i32
    %c0_i32_0 = arith.constant 0 : i32
    %c0_i32_1 = arith.constant 0 : i32
    return %c0_i32, %c0_i32_0 : i32, i32
  }
  func.func @transform_7(%arg0: i32) -> (i32, i32) {
    %c0_i32 = arith.constant 0 : i32
    %c0_i32_0 = arith.constant 0 : i32
    return %arg0, %c0_i32 : i32, i32
  }
  func.func @transform_8(%arg0: i32) -> (i32, i32) {
    %c0_i32 = arith.constant 0 : i32
    %c0_i32_0 = arith.constant 0 : i32
    return %arg0, %c0_i32 : i32, i32
  }
}

</mosaic_0001>

<llo_original>
// kernel: tpu_custom_call.1
$region0: #{tpu_custom_call.1}
  #allocation0 [shape = 'u32[]', space=smem, size = 0x4, offset = 0x4, fixed_abs, tag = 'smem constant byte address 0x4 - core index']
  #allocation1 [shape = 'u32[144,128]{1,0:T(1,128)}', space=vmem, size = 0x12000, scoped, tag = 'internal scratch']
  %s0 = inlined_call_operand.vmem [shape: f32[128,32], index: 0, kind: input, shape index: {}]
  %s1 = inlined_call_operand.vmem [shape: bf16[32,128], index: 1, kind: input, shape index: {}]
  %s2 = inlined_call_operand.vmem [shape: f32[1,128], index: 2, kind: input, shape index: {}]
  %s3 = inlined_call_operand.hbm [shape: bf16[128,128], index: 3, kind: input, shape index: {}]
  %s4 = inlined_call_operand.vmem [shape: f32[1,128], index: 4, kind: input, shape index: {}]
  %s5 = inlined_call_operand.vmem [shape: bf16[128,256], index: 5, kind: input, shape index: {}]
  %s6 = inlined_call_operand.vmem [shape: f32[1,256], index: 6, kind: input, shape index: {}]
  %s7 = inlined_call_operand.hbm [shape: f32[128,128], index: 7, kind: output, shape index: {0}]
  %s8 = inlined_call_operand.hbm [shape: f32[128,128], index: 8, kind: output, shape index: {1}]
  %9 = xla_tuple %s7, %s8
  %s10 = sld [smem:[#allocation0]]
  $region50: #{tpu_custom_call.1} parent=0
    _
  %s12 = ssub.s32 1, %s10
  %s13 = scalar_select 0, %s12, %s10
  $region1: #{tpu_custom_call.1} parent=0
    #allocation2 [shape = 'u8[32768]{0}', space=vmem, size = 0x8000, scoped, tag = 'input window, operand 3, single buffered']
    #allocation3 [shape = 's32[1]{0}', space=sflag, size = 0x4, scoped, tag = 'scoped memory for tpu_custom_call.1']
    #allocation4 [shape = 's32[1]{0}', space=sflag, size = 0x4, scoped, tag = 'scoped memory for tpu_custom_call.1']
    #allocation5 [shape = 'u8[65536]{0}', space=vmem, size = 0x10000, scoped, tag = 'output window, operand 0, single buffered']
    #allocation6 [shape = 'u8[65536]{0}', space=vmem, size = 0x10000, scoped, tag = 'output window, operand 1, single buffered']
    #allocation7 [shape = 's32[1]{0}', space=sflag, size = 0x4, scoped, tag = 'scoped memory for tpu_custom_call.1']
    %14 = vsyncpa [#allocation3], 0
    %15 = vsyncpa [#allocation4], 0
    %16 = vsyncpa [#allocation7], 0
    // Predicated region
    $region2: #{tpu_custom_call.1} parent=1 // pred_check
      _
    $region3: #{tpu_custom_call.1} parent=1 // pred_check_branch
      %18 = sbr.rel (0) target = $region5
    $region4: #{tpu_custom_call.1} parent=1 // pred_region
      _
    $region5: #{tpu_custom_call.1} parent=1 // pred_fallthru
      _
    // Predicated region
    $region6: #{tpu_custom_call.1} parent=1 // pred_check
      _
    $region7: #{tpu_custom_call.1} parent=1 // pred_check_branch
      %20 = sbr.rel (0) target = $region9
    $region8: #{tpu_custom_call.1} parent=1 // pred_region
      _
    $region9: #{tpu_custom_call.1} parent=1 // pred_fallthru
      _
    // Predicated region
    $region10: #{tpu_custom_call.1} parent=1 // pred_check
      _
    $region11: #{tpu_custom_call.1} parent=1 // pred_check_branch
      %22 = sbr.rel (0) target = $region13
    $region12: #{tpu_custom_call.1} parent=1 // pred_region
      _
    $region13: #{tpu_custom_call.1} parent=1 // pred_fallthru
      _
    // Predicated region
    $region14: #{tpu_custom_call.1} parent=1 // pred_check
      _
    $region15: #{tpu_custom_call.1} parent=1 // pred_check_branch
      %24 = sbr.rel (0) target = $region17
    $region16: #{tpu_custom_call.1} parent=1 // pred_region
      %s26 = ssub.s32 1024, 1024
      %27 = vsyncadd [#allocation3], %s26
      %s28 = sshll.u32 [#allocation2], 4
      %s29 = int_to_ptr.vmem [resolvable:$true] %s28
      %34 = dma.hbm_to_vmem [thread:$0]  %s3, 1024, %s29, [#allocation3], 64, 64, 4
    $region17: #{tpu_custom_call.1} parent=1 // pred_fallthru
      _
    // Predicated region
    $region18: #{tpu_custom_call.1} parent=1 // pred_check
      _
    $region19: #{tpu_custom_call.1} parent=1 // pred_check_branch
      %36 = sbr.rel (0) target = $region21
    $region20: #{tpu_custom_call.1} parent=1 // pred_region
      _
    $region21: #{tpu_custom_call.1} parent=1 // pred_fallthru
      _
    // Predicated region
    $region22: #{tpu_custom_call.1} parent=1 // pred_check
      _
    $region23: #{tpu_custom_call.1} parent=1 // pred_check_branch
      %38 = sbr.rel (0) target = $region25
    $region24: #{tpu_custom_call.1} parent=1 // pred_region
      _
    $region25: #{tpu_custom_call.1} parent=1 // pred_fallthru
      _
    // Predicated region
    $region26: #{tpu_custom_call.1} parent=1 // pred_check
      _
    $region27: #{tpu_custom_call.1} parent=1 // pred_check_branch
      %40 = sbr.rel (0) target = $region29
    $region28: #{tpu_custom_call.1} parent=1 // pred_region
      _
    $region29: #{tpu_custom_call.1} parent=1 // pred_fallthru
      _
    // Predicated region
    $region30: #{tpu_custom_call.1} parent=1 // pred_check
      _
    $region31: #{tpu_custom_call.1} parent=1 // pred_check_branch
      %42 = sbr.rel (0) target = $region33
    $region32: #{tpu_custom_call.1} parent=1 // pred_region
      %43 = dma.done [#allocation3], 1024
    $region33: #{tpu_custom_call.1} parent=1 // pred_fallthru
      _
    %v45 = vld [vmem:[%s0] sm:$0xff]
    %v46 = vld [vmem:[%s0 + $0x8] sm:$0xff]
    %v47 = vld [vmem:[%s0 + $0x10] sm:$0xff]
    %v48 = vld [vmem:[%s0 + $0x18] sm:$0xff]
    %v49 = vld [vmem:[%s0 + $0x20] sm:$0xff]
    %v50 = vld [vmem:[%s0 + $0x28] sm:$0xff]
    %v51 = vld [vmem:[%s0 + $0x30] sm:$0xff]
    %v52 = vld [vmem:[%s0 + $0x38] sm:$0xff]
    %v53 = vld [vmem:[%s0 + $0x40] sm:$0xff]
    %v54 = vld [vmem:[%s0 + $0x48] sm:$0xff]
    %v55 = vld [vmem:[%s0 + $0x50] sm:$0xff]
    %v56 = vld [vmem:[%s0 + $0x58] sm:$0xff]
    %v57 = vld [vmem:[%s0 + $0x60] sm:$0xff]
    %v58 = vld [vmem:[%s0 + $0x68] sm:$0xff]
    %v59 = vld [vmem:[%s0 + $0x70] sm:$0xff]
    %v60 = vld [vmem:[%s0 + $0x78] sm:$0xff]
    %v61 = vld [vmem:[%s1] sm:$0xf]
    %v62 = vld [vmem:[%s1 + $0x4] sm:$0xf]
    %v63 = vld [vmem:[%s1 + $0x8] sm:$0xf]
    %v64 = vld [vmem:[%s1 + $0xc] sm:$0xf]
    %v65 = vld [vmem:[%s2] sm:$0x1]
    %v66 = vpack.c.bf16 %v46, %v45
    %v67 = vpack.c.bf16 %v48, %v47
    %v68 = vpack.c.bf16 %v50, %v49
    %v69 = vpack.c.bf16 %v52, %v51
    %v70 = vpack.c.bf16 %v54, %v53
    %v71 = vpack.c.bf16 %v56, %v55
    %v72 = vpack.c.bf16 %v58, %v57
    %v73 = vpack.c.bf16 %v60, %v59
    %v75 = vlaneseq
    %v76 = vshrl.u32 %v75, 7
    %v77 = vsub.s32 0, %v76
    %v78 = vrot.slane %v65, %v77
    %v84 = vunpack.c.l.b16 %v61
    %v85 = vunpack.c.l.b16 %v62
    %v86 = vunpack.c.l.b16 %v63
    %v87 = vunpack.c.l.b16 %v64
    %v88 = vpack.c.b16 %v85, %v84
    %v89 = vpack.c.b16 %v87, %v86
    %vm92 = vcmask 261120
    %v94 = vsel %vm92, %v66, 0
    %v97 = vsel %vm92, %v67, 0
    %v100 = vsel %vm92, %v68, 0
    %v103 = vsel %vm92, %v69, 0
    %v106 = vsel %vm92, %v70, 0
    %v109 = vsel %vm92, %v71, 0
    %v112 = vsel %vm92, %v72, 0
    %v115 = vsel %vm92, %v73, 0
    %117 = vmatprep.subr.bf16.mxu0 0
    %118 = vmatpush1.bf16.msra.mxu0 %v88
    %119 = vmatprep.subr.bf16.mxu0 0
    %120 = vmatpush1.bf16.msra.mxu0 %v89
    %121 = vmatprep.subr.bf16.mxu0 0
    %122 = vmatpush1.bf16.msra.mxu0 0
    %123 = vmatprep.subr.bf16.mxu0 0
    %124 = vmatpush1.bf16.msra.mxu0 0
    %125 = vmatprep.subr.bf16.mxu0 0
    %126 = vmatpush1.bf16.msra.mxu0 0
    %127 = vmatprep.subr.bf16.mxu0 0
    %128 = vmatpush1.bf16.msra.mxu0 0
    %129 = vmatprep.subr.bf16.mxu0 0
    %130 = vmatpush1.bf16.msra.mxu0 0
    %131 = vmatprep.subr.bf16.mxu0 0
    %132 = vmatpush1.bf16.msra.mxu0 0
    %133 = vmatprep.subr.bf16.mxu0 0
    %134 = vmatpush1.bf16.msra.mxu0 0
    %135 = vmatprep.subr.bf16.mxu0 0
    %136 = vmatpush1.bf16.msra.mxu0 0
    %137 = vmatprep.subr.bf16.mxu0 0
    %138 = vmatpush1.bf16.msra.mxu0 0
    %139 = vmatprep.subr.bf16.mxu0 0
    %140 = vmatpush1.bf16.msra.mxu0 0
    %141 = vmatprep.subr.bf16.mxu0 0
    %142 = vmatpush1.bf16.msra.mxu0 0
    %143 = vmatprep.subr.bf16.mxu0 0
    %144 = vmatpush1.bf16.msra.mxu0 0
    %145 = vmatprep.subr.bf16.mxu0 0
    %146 = vmatpush1.bf16.msra.mxu0 0
    %147 = vmatprep.subr.bf16.mxu0 0
    %148 = vmatpush1.bf16.msra.mxu0 0
    %149 = vmatprep.mubr.bf16.mxu0 0
    %150 = vmatmul.mubr.bf16.gmra.mrb[0].mxu0 %v94
    %v151 = vpop.f32.mrb[0].mxu0
    %v152 = vadd.f32 %v78, %v151
    %v153 = vpop.f32.mrb[0].mxu0
    %v154 = vpop.f32.mrb[0].mxu0
    %v155 = vadd.f32 %v78, %v154
    %v156 = vpop.f32.mrb[0].mxu0
    %157 = vmatprep.mubr.bf16.mxu0 0
    %158 = vmatmul.mubr.bf16.gmra.mrb[0].mxu0 %v97
    %v159 = vpop.f32.mrb[0].mxu0
    %v160 = vadd.f32 %v78, %v159
    %v161 = vpop.f32.mrb[0].mxu0
    %v162 = vpop.f32.mrb[0].mxu0
    %v163 = vadd.f32 %v78, %v162
    %v164 = vpop.f32.mrb[0].mxu0
    %165 = vmatprep.mubr.bf16.mxu0 0
    %166 = vmatmul.mubr.bf16.gmra.mrb[0].mxu0 %v100
    %v167 = vpop.f32.mrb[0].mxu0
    %v168 = vadd.f32 %v78, %v167
    %v169 = vpop.f32.mrb[0].mxu0
    %v170 = vpop.f32.mrb[0].mxu0
    %v171 = vadd.f32 %v78, %v170
    %v172 = vpop.f32.mrb[0].mxu0
    %173 = vmatprep.mubr.bf16.mxu0 0
    %174 = vmatmul.mubr.bf16.gmra.mrb[0].mxu0 %v103
    %v175 = vpop.f32.mrb[0].mxu0
    %v176 = vadd.f32 %v78, %v175
    %v177 = vpop.f32.mrb[0].mxu0
    %v178 = vpop.f32.mrb[0].mxu0
    %v179 = vadd.f32 %v78, %v178
    %v180 = vpop.f32.mrb[0].mxu0
    %181 = vmatprep.mubr.bf16.mxu0 0
    %182 = vmatmul.mubr.bf16.gmra.mrb[0].mxu0 %v106
    %v183 = vpop.f32.mrb[0].mxu0
    %v184 = vadd.f32 %v78, %v183
    %v185 = vpop.f32.mrb[0].mxu0
    %v186 = vpop.f32.mrb[0].mxu0
    %v187 = vadd.f32 %v78, %v186
    %v188 = vpop.f32.mrb[0].mxu0
    %189 = vmatprep.mubr.bf16.mxu0 0
    %190 = vmatmul.mubr.bf16.gmra.mrb[0].mxu0 %v109
    %v191 = vpop.f32.mrb[0].mxu0
    %v192 = vadd.f32 %v78, %v191
    %v193 = vpop.f32.mrb[0].mxu0
    %v194 = vpop.f32.mrb[0].mxu0
    %v195 = vadd.f32 %v78, %v194
    %v196 = vpop.f32.mrb[0].mxu0
    %197 = vmatprep.mubr.bf16.mxu0 0
    %198 = vmatmul.mubr.bf16.gmra.mrb[0].mxu0 %v112
    %v199 = vpop.f32.mrb[0].mxu0
    %v200 = vadd.f32 %v78, %v199
    %v201 = vpop.f32.mrb[0].mxu0
    %v202 = vpop.f32.mrb[0].mxu0
    %v203 = vadd.f32 %v78, %v202
    %v204 = vpop.f32.mrb[0].mxu0
    %205 = vmatprep.mubr.bf16.mxu0 0
    %206 = vmatmul.mubr.bf16.gmra.mrb[0].mxu0 %v115
    %v207 = vpop.f32.mrb[0].mxu0
    %v208 = vadd.f32 %v78, %v207
    %v209 = vpop.f32.mrb[0].mxu0
    %v210 = vpop.f32.mrb[0].mxu0
    %v211 = vadd.f32 %v78, %v210
    %v212 = vpop.f32.mrb[0].mxu0
    %213 = vdwg.mxu0
    %v214 = vmax.f32 %v152, 0.0
    %v215 = vmax.f32 %v155, 0.0
    %v216 = vmax.f32 %v160, 0.0
    %v217 = vmax.f32 %v163, 0.0
    %v218 = vmax.f32 %v168, 0.0
    %v219 = vmax.f32 %v171, 0.0
    %v220 = vmax.f32 %v176, 0.0
    %v221 = vmax.f32 %v179, 0.0
    %v222 = vmax.f32 %v184, 0.0
    %v223 = vmax.f32 %v187, 0.0
    %v224 = vmax.f32 %v192, 0.0
    %v225 = vmax.f32 %v195, 0.0
    %v226 = vmax.f32 %v200, 0.0
    %v227 = vmax.f32 %v203, 0.0
    %v228 = vmax.f32 %v208, 0.0
    %v229 = vmax.f32 %v211, 0.0
    %v230 = vld [vmem:[#allocation2] sm:$0xf]
    %v231 = vld [vmem:[#allocation2 + $0x4] sm:$0xf]
    %v232 = vld [vmem:[#allocation2 + $0x8] sm:$0xf]
    %v233 = vld [vmem:[#allocation2 + $0xc] sm:$0xf]
    %v234 = vld [vmem:[#allocation2 + $0x10] sm:$0xf]
    %v235 = vld [vmem:[#allocation2 + $0x14] sm:$0xf]
    %v236 = vld [vmem:[#allocation2 + $0x18] sm:$0xf]
    %v237 = vld [vmem:[#allocation2 + $0x1c] sm:$0xf]
    %v238 = vld [vmem:[#allocation2 + $0x20] sm:$0xf]
    %v239 = vld [vmem:[#allocation2 + $0x24] sm:$0xf]
    %v240 = vld [vmem:[#allocation2 + $0x28] sm:$0xf]
    %v241 = vld [vmem:[#allocation2 + $0x2c] sm:$0xf]
    %v242 = vld [vmem:[#allocation2 + $0x30] sm:$0xf]
    %v243 = vld [vmem:[#allocation2 + $0x34] sm:$0xf]
    %v244 = vld [vmem:[#allocation2 + $0x38] sm:$0xf]
    %v245 = vld [vmem:[#allocation2 + $0x3c] sm:$0xf]
    %v246 = vld [vmem:[%s4] sm:$0x1]
    %v247 = vpack.c.bf16 %v215, %v214
    %v248 = vpack.c.bf16 %v217, %v216
    %v249 = vpack.c.bf16 %v219, %v218
    %v250 = vpack.c.bf16 %v221, %v220
    %v251 = vpack.c.bf16 %v223, %v222
    %v252 = vpack.c.bf16 %v225, %v224
    %v253 = vpack.c.bf16 %v227, %v226
    %v254 = vpack.c.bf16 %v229, %v228
    %v256 = vlaneseq
    %v257 = vshrl.u32 %v256, 7
    %v258 = vsub.s32 0, %v257
    %v259 = vrot.slane %v246, %v258
    %v277 = vunpack.c.l.b16 %v230
    %v278 = vunpack.c.l.b16 %v231
    %v279 = vunpack.c.l.b16 %v232
    %v280 = vunpack.c.l.b16 %v233
    %v281 = vunpack.c.l.b16 %v234
    %v282 = vunpack.c.l.b16 %v235
    %v283 = vunpack.c.l.b16 %v236
    %v284 = vunpack.c.l.b16 %v237
    %v285 = vunpack.c.l.b16 %v238
    %v286 = vunpack.c.l.b16 %v239
    %v287 = vunpack.c.l.b16 %v240
    %v288 = vunpack.c.l.b16 %v241
    %v289 = vunpack.c.l.b16 %v242
    %v290 = vunpack.c.l.b16 %v243
    %v291 = vunpack.c.l.b16 %v244
    %v292 = vunpack.c.l.b16 %v245
    %v293 = vpack.c.b16 %v278, %v277
    %v294 = vpack.c.b16 %v280, %v279
    %v295 = vpack.c.b16 %v282, %v281
    %v296 = vpack.c.b16 %v284, %v283
    %v297 = vpack.c.b16 %v286, %v285
    %v298 = vpack.c.b16 %v288, %v287
    %v299 = vpack.c.b16 %v290, %v289
    %v300 = vpack.c.b16 %v292, %v291
    %309 = vmatprep.subr.bf16.mxu0 0
    %310 = vmatpush1.bf16.msra.mxu0 %v293
    %311 = vmatprep.subr.bf16.mxu0 0
    %312 = vmatpush1.bf16.msra.mxu0 %v294
    %313 = vmatprep.subr.bf16.mxu0 0
    %314 = vmatpush1.bf16.msra.mxu0 %v295
    %315 = vmatprep.subr.bf16.mxu0 0
    %316 = vmatpush1.bf16.msra.mxu0 %v296
    %317 = vmatprep.subr.bf16.mxu0 0
    %318 = vmatpush1.bf16.msra.mxu0 %v297
    %319 = vmatprep.subr.bf16.mxu0 0
    %320 = vmatpush1.bf16.msra.mxu0 %v298
    %321 = vmatprep.subr.bf16.mxu0 0
    %322 = vmatpush1.bf16.msra.mxu0 %v299
    %323 = vmatprep.subr.bf16.mxu0 0
    %324 = vmatpush1.bf16.msra.mxu0 %v300
    %325 = vmatprep.subr.bf16.mxu0 0
    %326 = vmatpush1.bf16.msra.mxu0 0
    %327 = vmatprep.subr.bf16.mxu0 0
    %328 = vmatpush1.bf16.msra.mxu0 0
    %329 = vmatprep.subr.bf16.mxu0 0
    %330 = vmatpush1.bf16.msra.mxu0 0
    %331 = vmatprep.subr.bf16.mxu0 0
    %332 = vmatpush1.bf16.msra.mxu0 0
    %333 = vmatprep.subr.bf16.mxu0 0
    %334 = vmatpush1.bf16.msra.mxu0 0
    %335 = vmatprep.subr.bf16.mxu0 0
    %336 = vmatpush1.bf16.msra.mxu0 0
    %337 = vmatprep.subr.bf16.mxu0 0
    %338 = vmatpush1.bf16.msra.mxu0 0
    %339 = vmatprep.subr.bf16.mxu0 0
    %340 = vmatpush1.bf16.msra.mxu0 0
    %341 = vmatprep.mubr.bf16.mxu0 0
    %342 = vmatmul.mubr.bf16.gmra.mrb[0].mxu0 %v247
    %v343 = vpop.f32.mrb[0].mxu0
    %v344 = vadd.f32 %v259, %v343
    %v345 = vpop.f32.mrb[0].mxu0
    %v346 = vpop.f32.mrb[0].mxu0
    %v347 = vadd.f32 %v259, %v346
    %v348 = vpop.f32.mrb[0].mxu0
    %349 = vmatprep.mubr.bf16.mxu0 0
    %350 = vmatmul.mubr.bf16.gmra.mrb[0].mxu0 %v248
    %v351 = vpop.f32.mrb[0].mxu0
    %v352 = vadd.f32 %v259, %v351
    %v353 = vpop.f32.mrb[0].mxu0
    %v354 = vpop.f32.mrb[0].mxu0
    %v355 = vadd.f32 %v259, %v354
    %v356 = vpop.f32.mrb[0].mxu0
    %357 = vmatprep.mubr.bf16.mxu0 0
    %358 = vmatmul.mubr.bf16.gmra.mrb[0].mxu0 %v249
    %v359 = vpop.f32.mrb[0].mxu0
    %v360 = vadd.f32 %v259, %v359
    %v361 = vpop.f32.mrb[0].mxu0
    %v362 = vpop.f32.mrb[0].mxu0
    %v363 = vadd.f32 %v259, %v362
    %v364 = vpop.f32.mrb[0].mxu0
    %365 = vmatprep.mubr.bf16.mxu0 0
    %366 = vmatmul.mubr.bf16.gmra.mrb[0].mxu0 %v250
    %v367 = vpop.f32.mrb[0].mxu0
    %v368 = vadd.f32 %v259, %v367
    %v369 = vpop.f32.mrb[0].mxu0
    %v370 = vpop.f32.mrb[0].mxu0
    %v371 = vadd.f32 %v259, %v370
    %v372 = vpop.f32.mrb[0].mxu0
    %373 = vmatprep.mubr.bf16.mxu0 0
    %374 = vmatmul.mubr.bf16.gmra.mrb[0].mxu0 %v251
    %v375 = vpop.f32.mrb[0].mxu0
    %v376 = vadd.f32 %v259, %v375
    %v377 = vpop.f32.mrb[0].mxu0
    %v378 = vpop.f32.mrb[0].mxu0
    %v379 = vadd.f32 %v259, %v378
    %v380 = vpop.f32.mrb[0].mxu0
    %381 = vmatprep.mubr.bf16.mxu0 0
    %382 = vmatmul.mubr.bf16.gmra.mrb[0].mxu0 %v252
    %v383 = vpop.f32.mrb[0].mxu0
    %v384 = vadd.f32 %v259, %v383
    %v385 = vpop.f32.mrb[0].mxu0
    %v386 = vpop.f32.mrb[0].mxu0
    %v387 = vadd.f32 %v259, %v386
    %v388 = vpop.f32.mrb[0].mxu0
    %389 = vmatprep.mubr.bf16.mxu0 0
    %390 = vmatmul.mubr.bf16.gmra.mrb[0].mxu0 %v253
    %v391 = vpop.f32.mrb[0].mxu0
    %v392 = vadd.f32 %v259, %v391
    %v393 = vpop.f32.mrb[0].mxu0
    %v394 = vpop.f32.mrb[0].mxu0
    %v395 = vadd.f32 %v259, %v394
    %v396 = vpop.f32.mrb[0].mxu0
    %397 = vmatprep.mubr.bf16.mxu0 0
    %398 = vmatmul.mubr.bf16.gmra.mrb[0].mxu0 %v254
    %v399 = vpop.f32.mrb[0].mxu0
    %v400 = vadd.f32 %v259, %v399
    %v401 = vpop.f32.mrb[0].mxu0
    %v402 = vpop.f32.mrb[0].mxu0
    %v403 = vadd.f32 %v259, %v402
    %v404 = vpop.f32.mrb[0].mxu0
    %405 = vdwg.mxu0
    %v406 = vmax.f32 %v344, 0.0
    %v407 = vmax.f32 %v347, 0.0
    %v408 = vmax.f32 %v352, 0.0
    %v409 = vmax.f32 %v355, 0.0
    %v410 = vmax.f32 %v360, 0.0
    %v411 = vmax.f32 %v363, 0.0
    %v412 = vmax.f32 %v368, 0.0
    %v413 = vmax.f32 %v371, 0.0
    %v414 = vmax.f32 %v376, 0.0
    %v415 = vmax.f32 %v379, 0.0
    %v416 = vmax.f32 %v384, 0.0
    %v417 = vmax.f32 %v387, 0.0
    %v418 = vmax.f32 %v392, 0.0
    %v419 = vmax.f32 %v395, 0.0
    %v420 = vmax.f32 %v400, 0.0
    %v421 = vmax.f32 %v403, 0.0
    %v422 = vld [vmem:[%s5] sm:$0xff]
    %v423 = vld [vmem:[%s5 + $0x8] sm:$0xff]
    %v424 = vld [vmem:[%s5 + $0x10] sm:$0xff]
    %v425 = vld [vmem:[%s5 + $0x18] sm:$0xff]
    %v426 = vld [vmem:[%s5 + $0x20] sm:$0xff]
    %v427 = vld [vmem:[%s5 + $0x28] sm:$0xff]
    %v428 = vld [vmem:[%s5 + $0x30] sm:$0xff]
    %v429 = vld [vmem:[%s5 + $0x38] sm:$0xff]
    %v430 = vld [vmem:[%s5 + $0x40] sm:$0xff]
    %v431 = vld [vmem:[%s5 + $0x48] sm:$0xff]
    %v432 = vld [vmem:[%s5 + $0x50] sm:$0xff]
    %v433 = vld [vmem:[%s5 + $0x58] sm:$0xff]
    %v434 = vld [vmem:[%s5 + $0x60] sm:$0xff]
    %v435 = vld [vmem:[%s5 + $0x68] sm:$0xff]
    %v436 = vld [vmem:[%s5 + $0x70] sm:$0xff]
    %v437 = vld [vmem:[%s5 + $0x78] sm:$0xff]
    %v438 = vld [vmem:[%s6] sm:$0x3]
    %v439 = vpack.c.bf16 %v407, %v406
    %v440 = vpack.c.bf16 %v409, %v408
    %v441 = vpack.c.bf16 %v411, %v410
    %v442 = vpack.c.bf16 %v413, %v412
    %v443 = vpack.c.bf16 %v415, %v414
    %v444 = vpack.c.bf16 %v417, %v416
    %v445 = vpack.c.bf16 %v419, %v418
    %v446 = vpack.c.bf16 %v421, %v420
    %v448 = vlaneseq
    %v449 = vshrl.u32 %v448, 7
    %v450 = vsub.s32 0, %v449
    %v451 = vrot.slane %v438, %v450
    %v452 = vlaneseq
    %v453 = vshrl.u32 %v452, 7
    %v454 = vsub.s32 1, %v453
    %v455 = vrot.slane %v438, %v454
    %v474 = vunpack.c.l.b16 %v422
    %v475 = vunpack.c.h.b16 %v422
    %v476 = vunpack.c.l.b16 %v423
    %v477 = vunpack.c.h.b16 %v423
    %v478 = vunpack.c.l.b16 %v424
    %v479 = vunpack.c.h.b16 %v424
    %v480 = vunpack.c.l.b16 %v425
    %v481 = vunpack.c.h.b16 %v425
    %v482 = vunpack.c.l.b16 %v426
    %v483 = vunpack.c.h.b16 %v426
    %v484 = vunpack.c.l.b16 %v427
    %v485 = vunpack.c.h.b16 %v427
    %v486 = vunpack.c.l.b16 %v428
    %v487 = vunpack.c.h.b16 %v428
    %v488 = vunpack.c.l.b16 %v429
    %v489 = vunpack.c.h.b16 %v429
    %v490 = vunpack.c.l.b16 %v430
    %v491 = vunpack.c.h.b16 %v430
    %v492 = vunpack.c.l.b16 %v431
    %v493 = vunpack.c.h.b16 %v431
    %v494 = vunpack.c.l.b16 %v432
    %v495 = vunpack.c.h.b16 %v432
    %v496 = vunpack.c.l.b16 %v433
    %v497 = vunpack.c.h.b16 %v433
    %v498 = vunpack.c.l.b16 %v434
    %v499 = vunpack.c.h.b16 %v434
    %v500 = vunpack.c.l.b16 %v435
    %v501 = vunpack.c.h.b16 %v435
    %v502 = vunpack.c.l.b16 %v436
    %v503 = vunpack.c.h.b16 %v436
    %v504 = vunpack.c.l.b16 %v437
    %v505 = vunpack.c.h.b16 %v437
    %v506 = vpack.c.b16 %v476, %v474
    %v507 = vpack.c.b16 %v477, %v475
    %v508 = vpack.c.b16 %v480, %v478
    %v509 = vpack.c.b16 %v481, %v479
    %v510 = vpack.c.b16 %v484, %v482
    %v511 = vpack.c.b16 %v485, %v483
    %v512 = vpack.c.b16 %v488, %v486
    %v513 = vpack.c.b16 %v489, %v487
    %v514 = vpack.c.b16 %v492, %v490
    %v515 = vpack.c.b16 %v493, %v491
    %v516 = vpack.c.b16 %v496, %v494
    %v517 = vpack.c.b16 %v497, %v495
    %v518 = vpack.c.b16 %v500, %v498
    %v519 = vpack.c.b16 %v501, %v499
    %v520 = vpack.c.b16 %v504, %v502
    %v521 = vpack.c.b16 %v505, %v503
    %538 = vmatprep.subr.bf16.mxu0 %v507
    %539 = vmatpush1.bf16.msra.mxu0 %v506
    %540 = vmatprep.subr.bf16.mxu0 %v509
    %541 = vmatpush1.bf16.msra.mxu0 %v508
    %542 = vmatprep.subr.bf16.mxu0 %v511
    %543 = vmatpush1.bf16.msra.mxu0 %v510
    %544 = vmatprep.subr.bf16.mxu0 %v513
    %545 = vmatpush1.bf16.msra.mxu0 %v512
    %546 = vmatprep.subr.bf16.mxu0 %v515
    %547 = vmatpush1.bf16.msra.mxu0 %v514
    %548 = vmatprep.subr.bf16.mxu0 %v517
    %549 = vmatpush1.bf16.msra.mxu0 %v516
    %550 = vmatprep.subr.bf16.mxu0 %v519
    %551 = vmatpush1.bf16.msra.mxu0 %v518
    %552 = vmatprep.subr.bf16.mxu0 %v521
    %553 = vmatpush1.bf16.msra.mxu0 %v520
    %554 = vmatprep.subr.bf16.mxu0 0
    %555 = vmatpush1.bf16.msra.mxu0 0
    %556 = vmatprep.subr.bf16.mxu0 0
    %557 = vmatpush1.bf16.msra.mxu0 0
    %558 = vmatprep.subr.bf16.mxu0 0
    %559 = vmatpush1.bf16.msra.mxu0 0
    %560 = vmatprep.subr.bf16.mxu0 0
    %561 = vmatpush1.bf16.msra.mxu0 0
    %562 = vmatprep.subr.bf16.mxu0 0
    %563 = vmatpush1.bf16.msra.mxu0 0
    %564 = vmatprep.subr.bf16.mxu0 0
    %565 = vmatpush1.bf16.msra.mxu0 0
    %566 = vmatprep.subr.bf16.mxu0 0
    %567 = vmatpush1.bf16.msra.mxu0 0
    %568 = vmatprep.subr.bf16.mxu0 0
    %569 = vmatpush1.bf16.msra.mxu0 0
    %570 = vmatprep.mubr.bf16.mxu0 0
    %571 = vmatmul.mubr.bf16.gmra.mrb[0].mxu0 %v439
    %v572 = vpop.f32.mrb[0].mxu0
    %v573 = vadd.f32 %v451, %v572
    %v574 = vpop.f32.mrb[0].mxu0
    %v575 = vadd.f32 %v455, %v574
    %v576 = vpop.f32.mrb[0].mxu0
    %v577 = vadd.f32 %v451, %v576
    %v578 = vpop.f32.mrb[0].mxu0
    %v579 = vadd.f32 %v455, %v578
    %580 = vmatprep.mubr.bf16.mxu0 0
    %581 = vmatmul.mubr.bf16.gmra.mrb[0].mxu0 %v440
    %v582 = vpop.f32.mrb[0].mxu0
    %v583 = vadd.f32 %v451, %v582
    %v584 = vpop.f32.mrb[0].mxu0
    %v585 = vadd.f32 %v455, %v584
    %v586 = vpop.f32.mrb[0].mxu0
    %v587 = vadd.f32 %v451, %v586
    %v588 = vpop.f32.mrb[0].mxu0
    %v589 = vadd.f32 %v455, %v588
    %590 = vmatprep.mubr.bf16.mxu0 0
    %591 = vmatmul.mubr.bf16.gmra.mrb[0].mxu0 %v441
    %v592 = vpop.f32.mrb[0].mxu0
    %v593 = vadd.f32 %v451, %v592
    %v594 = vpop.f32.mrb[0].mxu0
    %v595 = vadd.f32 %v455, %v594
    %v596 = vpop.f32.mrb[0].mxu0
    %v597 = vadd.f32 %v451, %v596
    %v598 = vpop.f32.mrb[0].mxu0
    %v599 = vadd.f32 %v455, %v598
    %600 = vmatprep.mubr.bf16.mxu0 0
    %601 = vmatmul.mubr.bf16.gmra.mrb[0].mxu0 %v442
    %v602 = vpop.f32.mrb[0].mxu0
    %v603 = vadd.f32 %v451, %v602
    %v604 = vpop.f32.mrb[0].mxu0
    %v605 = vadd.f32 %v455, %v604
    %v606 = vpop.f32.mrb[0].mxu0
    %v607 = vadd.f32 %v451, %v606
    %v608 = vpop.f32.mrb[0].mxu0
    %v609 = vadd.f32 %v455, %v608
    %610 = vmatprep.mubr.bf16.mxu0 0
    %611 = vmatmul.mubr.bf16.gmra.mrb[0].mxu0 %v443
    %v612 = vpop.f32.mrb[0].mxu0
    %v613 = vadd.f32 %v451, %v612
    %v614 = vpop.f32.mrb[0].mxu0
    %v615 = vadd.f32 %v455, %v614
    %v616 = vpop.f32.mrb[0].mxu0
    %v617 = vadd.f32 %v451, %v616
    %v618 = vpop.f32.mrb[0].mxu0
    %v619 = vadd.f32 %v455, %v618
    %620 = vmatprep.mubr.bf16.mxu0 0
    %621 = vmatmul.mubr.bf16.gmra.mrb[0].mxu0 %v444
    %v622 = vpop.f32.mrb[0].mxu0
    %v623 = vadd.f32 %v451, %v622
    %v624 = vpop.f32.mrb[0].mxu0
    %v625 = vadd.f32 %v455, %v624
    %v626 = vpop.f32.mrb[0].mxu0
    %v627 = vadd.f32 %v451, %v626
    %v628 = vpop.f32.mrb[0].mxu0
    %v629 = vadd.f32 %v455, %v628
    %630 = vmatprep.mubr.bf16.mxu0 0
    %631 = vmatmul.mubr.bf16.gmra.mrb[0].mxu0 %v445
    %v632 = vpop.f32.mrb[0].mxu0
    %v633 = vadd.f32 %v451, %v632
    %v634 = vpop.f32.mrb[0].mxu0
    %v635 = vadd.f32 %v455, %v634
    %v636 = vpop.f32.mrb[0].mxu0
    %v637 = vadd.f32 %v451, %v636
    %v638 = vpop.f32.mrb[0].mxu0
    %v639 = vadd.f32 %v455, %v638
    %640 = vmatprep.mubr.bf16.mxu0 0
    %641 = vmatmul.mubr.bf16.gmra.mrb[0].mxu0 %v446
    %v642 = vpop.f32.mrb[0].mxu0
    %v643 = vadd.f32 %v451, %v642
    %v644 = vpop.f32.mrb[0].mxu0
    %v645 = vadd.f32 %v455, %v644
    %v646 = vpop.f32.mrb[0].mxu0
    %v647 = vadd.f32 %v451, %v646
    %v648 = vpop.f32.mrb[0].mxu0
    %v649 = vadd.f32 %v455, %v648
    %650 = vdwg.mxu0
    %v651 = vtanh.pop %v575
    %v652 = vtanh.pop %v579
    %v653 = vtanh.pop %v585
    %v654 = vtanh.pop %v589
    %v655 = vtanh.pop %v595
    %v656 = vtanh.pop %v599
    %v657 = vtanh.pop %v605
    %v658 = vtanh.pop %v609
    %v659 = vtanh.pop %v615
    %v660 = vtanh.pop %v619
    %v661 = vtanh.pop %v625
    %v662 = vtanh.pop %v629
    %v663 = vtanh.pop %v635
    %v664 = vtanh.pop %v639
    %v665 = vtanh.pop %v645
    %v666 = vtanh.pop %v649
    %v667 = vadd.f32 %v651, 1.0
    %v668 = vadd.f32 %v652, 1.0
    %v669 = vadd.f32 %v653, 1.0
    %v670 = vadd.f32 %v654, 1.0
    %v671 = vadd.f32 %v655, 1.0
    %v672 = vadd.f32 %v656, 1.0
    %v673 = vadd.f32 %v657, 1.0
    %v674 = vadd.f32 %v658, 1.0
    %v675 = vadd.f32 %v659, 1.0
    %v676 = vadd.f32 %v660, 1.0
    %v677 = vadd.f32 %v661, 1.0
    %v678 = vadd.f32 %v662, 1.0
    %v679 = vadd.f32 %v663, 1.0
    %v680 = vadd.f32 %v664, 1.0
    %v681 = vadd.f32 %v665, 1.0
    %v682 = vadd.f32 %v666, 1.0
    %v683 = vmul.f32 %v667, 6.0
    %v684 = vmul.f32 %v668, 6.0
    %v685 = vmul.f32 %v669, 6.0
    %v686 = vmul.f32 %v670, 6.0
    %v687 = vmul.f32 %v671, 6.0
    %v688 = vmul.f32 %v672, 6.0
    %v689 = vmul.f32 %v673, 6.0
    %v690 = vmul.f32 %v674, 6.0
    %v691 = vmul.f32 %v675, 6.0
    %v692 = vmul.f32 %v676, 6.0
    %v693 = vmul.f32 %v677, 6.0
    %v694 = vmul.f32 %v678, 6.0
    %v695 = vmul.f32 %v679, 6.0
    %v696 = vmul.f32 %v680, 6.0
    %v697 = vmul.f32 %v681, 6.0
    %v698 = vmul.f32 %v682, 6.0
    %v699 = vadd.f32 %v683, -10.0
    %v700 = vadd.f32 %v684, -10.0
    %v701 = vadd.f32 %v685, -10.0
    %v702 = vadd.f32 %v686, -10.0
    %v703 = vadd.f32 %v687, -10.0
    %v704 = vadd.f32 %v688, -10.0
    %v705 = vadd.f32 %v689, -10.0
    %v706 = vadd.f32 %v690, -10.0
    %v707 = vadd.f32 %v691, -10.0
    %v708 = vadd.f32 %v692, -10.0
    %v709 = vadd.f32 %v693, -10.0
    %v710 = vadd.f32 %v694, -10.0
    %v711 = vadd.f32 %v695, -10.0
    %v712 = vadd.f32 %v696, -10.0
    %v713 = vadd.f32 %v697, -10.0
    %v714 = vadd.f32 %v698, -10.0
    %v715 = vmul.f32 %v699, 1.442695
    %v716 = vpow.pop %v715
    %v717 = vmul.f32 %v700, 1.442695
    %v718 = vpow.pop %v717
    %v719 = vmul.f32 %v701, 1.442695
    %v720 = vpow.pop %v719
    %v721 = vmul.f32 %v702, 1.442695
    %v722 = vpow.pop %v721
    %v723 = vmul.f32 %v703, 1.442695
    %v724 = vpow.pop %v723
    %v725 = vmul.f32 %v704, 1.442695
    %v726 = vpow.pop %v725
    %v727 = vmul.f32 %v705, 1.442695
    %v728 = vpow.pop %v727
    %v729 = vmul.f32 %v706, 1.442695
    %v730 = vpow.pop %v729
    %v731 = vmul.f32 %v707, 1.442695
    %v732 = vpow.pop %v731
    %v733 = vmul.f32 %v708, 1.442695
    %v734 = vpow.pop %v733
    %v735 = vmul.f32 %v709, 1.442695
    %v736 = vpow.pop %v735
    %v737 = vmul.f32 %v710, 1.442695
    %v738 = vpow.pop %v737
    %v739 = vmul.f32 %v711, 1.442695
    %v740 = vpow.pop %v739
    %v741 = vmul.f32 %v712, 1.442695
    %v742 = vpow.pop %v741
    %v743 = vmul.f32 %v713, 1.442695
    %v744 = vpow.pop %v743
    %v745 = vmul.f32 %v714, 1.442695
    %v746 = vpow.pop %v745
    %747 = vst [vmem:[#allocation5] sm:$0xff] %v573
    %748 = vst [vmem:[#allocation5 + $0x8] sm:$0xff] %v577
    %749 = vst [vmem:[#allocation5 + $0x10] sm:$0xff] %v583
    %750 = vst [vmem:[#allocation5 + $0x18] sm:$0xff] %v587
    %751 = vst [vmem:[#allocation5 + $0x20] sm:$0xff] %v593
    %752 = vst [vmem:[#allocation5 + $0x28] sm:$0xff] %v597
    %753 = vst [vmem:[#allocation5 + $0x30] sm:$0xff] %v603
    %754 = vst [vmem:[#allocation5 + $0x38] sm:$0xff] %v607
    %755 = vst [vmem:[#allocation5 + $0x40] sm:$0xff] %v613
    %756 = vst [vmem:[#allocation5 + $0x48] sm:$0xff] %v617
    %757 = vst [vmem:[#allocation5 + $0x50] sm:$0xff] %v623
    %758 = vst [vmem:[#allocation5 + $0x58] sm:$0xff] %v627
    %759 = vst [vmem:[#allocation5 + $0x60] sm:$0xff] %v633
    %760 = vst [vmem:[#allocation5 + $0x68] sm:$0xff] %v637
    %761 = vst [vmem:[#allocation5 + $0x70] sm:$0xff] %v643
    %762 = vst [vmem:[#allocation5 + $0x78] sm:$0xff] %v647
    %763 = vst [vmem:[#allocation6] sm:$0xff] %v716
    %764 = vst [vmem:[#allocation6 + $0x8] sm:$0xff] %v718
    %765 = vst [vmem:[#allocation6 + $0x10] sm:$0xff] %v720
    %766 = vst [vmem:[#allocation6 + $0x18] sm:$0xff] %v722
    %767 = vst [vmem:[#allocation6 + $0x20] sm:$0xff] %v724
    %768 = vst [vmem:[#allocation6 + $0x28] sm:$0xff] %v726
    %769 = vst [vmem:[#allocation6 + $0x30] sm:$0xff] %v728
    %770 = vst [vmem:[#allocation6 + $0x38] sm:$0xff] %v730
    %771 = vst [vmem:[#allocation6 + $0x40] sm:$0xff] %v732
    %772 = vst [vmem:[#allocation6 + $0x48] sm:$0xff] %v734
    %773 = vst [vmem:[#allocation6 + $0x50] sm:$0xff] %v736
    %774 = vst [vmem:[#allocation6 + $0x58] sm:$0xff] %v738
    %775 = vst [vmem:[#allocation6 + $0x60] sm:$0xff] %v740
    %776 = vst [vmem:[#allocation6 + $0x68] sm:$0xff] %v742
    %777 = vst [vmem:[#allocation6 + $0x70] sm:$0xff] %v744
    %778 = vst [vmem:[#allocation6 + $0x78] sm:$0xff] %v746
    // Predicated region
    $region34: #{tpu_custom_call.1} parent=1 // pred_check
      _
    $region35: #{tpu_custom_call.1} parent=1 // pred_check_branch
      %780 = sbr.rel (0) target = $region37
    $region36: #{tpu_custom_call.1} parent=1 // pred_region
      %s782 = ssub.s32 2048, 2048
      %783 = vsyncadd [#allocation4], %s782
      %s784 = sshll.u32 [#allocation5], 4
      %s785 = int_to_ptr.vmem [resolvable:$true] %s784
      %790 = dma.vmem_to_hbm [thread:$0]  %s785, 2048, %s7, [#allocation4], 128, 128, 8
    $region37: #{tpu_custom_call.1} parent=1 // pred_fallthru
      _
    // Predicated region
    $region38: #{tpu_custom_call.1} parent=1 // pred_check
      _
    $region39: #{tpu_custom_call.1} parent=1 // pred_check_branch
      %792 = sbr.rel (0) target = $region41
    $region40: #{tpu_custom_call.1} parent=1 // pred_region
      %s794 = ssub.s32 2048, 2048
      %795 = vsyncadd [#allocation7], %s794
      %s796 = sshll.u32 [#allocation6], 4
      %s797 = int_to_ptr.vmem [resolvable:$true] %s796
      %802 = dma.vmem_to_hbm [thread:$0]  %s797, 2048, %s8, [#allocation7], 128, 128, 8
    $region41: #{tpu_custom_call.1} parent=1 // pred_fallthru
      _
    // Predicated region
    $region42: #{tpu_custom_call.1} parent=1 // pred_check
      _
    $region43: #{tpu_custom_call.1} parent=1 // pred_check_branch
      %804 = sbr.rel (0) target = $region45
    $region44: #{tpu_custom_call.1} parent=1 // pred_region
      %805 = dma.done [#allocation4], 2048
    $region45: #{tpu_custom_call.1} parent=1 // pred_fallthru
      _
    // Predicated region
    $region46: #{tpu_custom_call.1} parent=1 // pred_check
      _
    $region47: #{tpu_custom_call.1} parent=1 // pred_check_branch
      %807 = sbr.rel (0) target = $region49
    $region48: #{tpu_custom_call.1} parent=1 // pred_region
      %808 = dma.done [#allocation7], 2048
    $region49: #{tpu_custom_call.1} parent=1 // pred_fallthru
      _
    %809 = vsyncpa [#allocation3], 1
    %810 = vsyncpa [#allocation4], 1
    %811 = vsyncpa [#allocation7], 1

</llo_original>
